<compile_context>
chip_gen: v7x
topology: tpu7x:2x2x1
jax: 0.10.0
libtpu: 0.0.40
codegen_flags: <defaults>
</compile_context>

<pallas_src>
import functools

import jax
import jax.numpy as jnp
from jax.experimental import pallas as pl
from jax.experimental.pallas import tpu as pltpu

INPUT_SIZE = 28 * 28     # 784
HIDDEN_SIZE = 128
NUM_CLASSES = 10

N_PAD = 128              # classifier head padded to one full lane group


def _round_up(n: int, m: int) -> int:
    return ((n + m - 1) // m) * m


def mlp_kernel(x_ref, w1_ref, b1_ref, w2_ref, b2_ref, o_ref):
    # In-kernel cast to bf16 so both matmuls run natively on the MXU with f32
    # accumulation; the cast is VPU work hidden under the (mem-bound) DMAs.
    x = x_ref[...].astype(jnp.bfloat16)
    w1 = w1_ref[...].astype(jnp.bfloat16)
    # fc1: (TB, 784) @ (784, 128) -> (TB, 128), f32 accumulation on the MXU.
    h = jnp.dot(x, w1, preferred_element_type=jnp.float32)
    # bias + ReLU in f32 on the VPU.
    h = jnp.maximum(h + b1_ref[...], 0.0)
    # fc2: (TB, 128) @ (128, 128) -> (TB, 128) (head zero-padded to 128 lanes).
    out = jnp.dot(h.astype(jnp.bfloat16), w2_ref[...].astype(jnp.bfloat16),
                  preferred_element_type=jnp.float32)
    out = out + b2_ref[...]
    # Lane-dense (TB, 128) unmasked store.
    o_ref[...] = out.astype(o_ref.dtype)


@functools.partial(jax.jit, static_argnames=("batch_tile",))
def neural_net_forward(x, w1, b1, w2, b2, *, batch_tile=512):
    """y = relu(x.view(-1, 784) @ w1 + b1) @ w2 + b2  (f32 result).

    w1: (784, 128), b1: (128,) or (1, 128), w2: (128, 10), b2: (10,) or (1, 10)
    (weights transposed relative to torch.nn.Linear's (out, in) storage).
    """
    x2d = x.reshape(-1, INPUT_SIZE)
    B = x2d.shape[0]

    # Effective batch tile: don't over-pad tiny batches, keep sublane-aligned.
    tb = _round_up(min(batch_tile, _round_up(B, 8)), 8)
    B_pad = _round_up(B, tb)

    # Batch padding only when needed (no-op pad for divisible batches).
    x_p = jnp.pad(x2d, ((0, B_pad - B), (0, 0)))

    # Small one-time per-call pads/reshapes (weights/biases only, ~tiny).
    w1_p = w1.astype(jnp.float32)
    b1_p = b1.astype(jnp.float32).reshape(1, HIDDEN_SIZE)
    w2_p = jnp.pad(w2.astype(jnp.float32),
                   ((0, 0), (0, N_PAD - NUM_CLASSES)))
    b2_p = jnp.pad(b2.astype(jnp.float32).reshape(1, NUM_CLASSES),
                   ((0, 0), (0, N_PAD - NUM_CLASSES)))

    grid = (B_pad // tb,)
    out = pl.pallas_call(
        mlp_kernel,
        out_shape=jax.ShapeDtypeStruct((B_pad, N_PAD), jnp.float32),
        grid_spec=pltpu.PrefetchScalarGridSpec(
            num_scalar_prefetch=0,
            grid=grid,
            in_specs=[
                # activations: tile over (padded) batch, full 784 contraction
                pl.BlockSpec((tb, INPUT_SIZE), lambda i: (i, 0)),
                # weights / biases: constant index -> resident across the grid
                pl.BlockSpec((INPUT_SIZE, HIDDEN_SIZE), lambda i: (0, 0)),
                pl.BlockSpec((1, HIDDEN_SIZE), lambda i: (0, 0)),
                pl.BlockSpec((HIDDEN_SIZE, N_PAD), lambda i: (0, 0)),
                pl.BlockSpec((1, N_PAD), lambda i: (0, 0)),
            ],
            out_specs=pl.BlockSpec((tb, N_PAD), lambda i: (i, 0)),
        ),
        compiler_params=pltpu.CompilerParams(
            dimension_semantics=("parallel",)),
    )(x_p, w1_p, b1_p, w2_p, b2_p)

    # Strip batch padding and the padded classifier lanes.
    return out[:B, :NUM_CLASSES]


def init_params(key):
    k1, k2, k3, k4 = jax.random.split(key, 4)
    # Uniform fan-in scaled init (like nn.Linear default), stored transposed.
    lim1 = 1.0 / (INPUT_SIZE ** 0.5)
    lim2 = 1.0 / (HIDDEN_SIZE ** 0.5)
    w1 = jax.random.uniform(k1, (INPUT_SIZE, HIDDEN_SIZE), jnp.float32, -lim1, lim1)
    b1 = jax.random.uniform(k2, (1, HIDDEN_SIZE), jnp.float32, -lim1, lim1)
    w2 = jax.random.uniform(k3, (HIDDEN_SIZE, NUM_CLASSES), jnp.float32, -lim2, lim2)
    b2 = jax.random.uniform(k4, (1, NUM_CLASSES), jnp.float32, -lim2, lim2)
    return w1, b1, w2, b2


if __name__ == "__main__":
    key = jax.random.PRNGKey(0)
    kx, kp = jax.random.split(key)

    # Small MNIST-like batch: (B, 1, 28, 28), flattened inside the wrapper.
    B = 8
    x = jax.random.normal(kx, (B, 1, 28, 28), dtype=jnp.float32)
    w1, b1, w2, b2 = init_params(kp)

    out = neural_net_forward(x, w1, b1, w2, b2)
    out = jax.block_until_ready(out)
    assert out.shape == (B, NUM_CLASSES)
    assert out.dtype == jnp.float32

    # Reference 1: exact bf16-input emulation of the kernel's math (tight tol).
    x2d = x.reshape(-1, INPUT_SIZE)
    xb = x2d.astype(jnp.bfloat16)
    w1b = w1.astype(jnp.bfloat16)
    w2b = w2.astype(jnp.bfloat16)
    h = jnp.dot(xb, w1b, preferred_element_type=jnp.float32) + b1
    h = jnp.maximum(h, 0.0)
    ref_bf16 = jnp.dot(h.astype(jnp.bfloat16), w2b,
                       preferred_element_type=jnp.float32) + b2
    assert jnp.allclose(out, ref_bf16, atol=5e-3, rtol=5e-3)

    # Reference 2: pure f32 PyTorch-equivalent math (loose tol for bf16 MXU).
    ref_f32 = jnp.maximum(x2d @ w1 + b1, 0.0) @ w2 + b2
    assert jnp.allclose(out, ref_f32, atol=5e-2, rtol=5e-2)

    # Also exercise a non-tile-divisible batch to check the padding path.
    B2 = 37
    x2 = jax.random.normal(kx, (B2, 1, 28, 28), dtype=jnp.float32)
    out2 = jax.block_until_ready(neural_net_forward(x2, w1, b1, w2, b2))
    ref2 = jnp.maximum(x2.reshape(-1, INPUT_SIZE) @ w1 + b1, 0.0) @ w2 + b2
    assert out2.shape == (B2, NUM_CLASSES)
    assert jnp.allclose(out2, ref2, atol=5e-2, rtol=5e-2)

    print("KERNEL_OK")
</pallas_src>

<mosaic_0001>
module attributes {stable_mosaic.version = 11 : i64} {
  func.func @mlp_kernel(%arg0: i32, %arg1: memref<8x784xf32, #tpu.memory_space<vmem>>, %arg2: memref<784x128xf32, #tpu.memory_space<vmem>>, %arg3: memref<1x128xf32, #tpu.memory_space<vmem>>, %arg4: memref<128x128xf32, #tpu.memory_space<vmem>>, %arg5: memref<1x128xf32, #tpu.memory_space<vmem>>, %arg6: memref<8x128xf32, #tpu.memory_space<vmem>>) attributes {dimension_semantics = [#tpu.dimension_semantics<parallel>], iteration_bounds = array<i64: 1>, scalar_prefetch = 0 : i64, scratch_operands = 0 : i64, tpu.core_type = #tpu.core_type<tc>, window_params = [{transform_indices = @transform_0, window_bounds = array<i64: 8, 784>}, {pipeline_mode = #tpu.pipeline_mode<synchronous>, transform_indices = @transform_1, window_bounds = array<i64: 784, 128>}, {pipeline_mode = #tpu.pipeline_mode<synchronous>, transform_indices = @transform_2, window_bounds = array<i64: 1, 128>}, {pipeline_mode = #tpu.pipeline_mode<synchronous>, transform_indices = @transform_3, window_bounds = array<i64: 128, 128>}, {pipeline_mode = #tpu.pipeline_mode<synchronous>, transform_indices = @transform_4, window_bounds = array<i64: 1, 128>}, {transform_indices = @transform_5, window_bounds = array<i64: 8, 128>}]} {
    %c0 = arith.constant 0 : index
    %c0_0 = arith.constant 0 : index
    %0 = vector.load %arg1[%c0, %c0_0] : memref<8x784xf32, #tpu.memory_space<vmem>>, vector<8x784xf32>
    %1 = arith.truncf %0 : vector<8x784xf32> to vector<8x784xbf16>
    %c0_1 = arith.constant 0 : index
    %c0_2 = arith.constant 0 : index
    %2 = vector.load %arg2[%c0_1, %c0_2] : memref<784x128xf32, #tpu.memory_space<vmem>>, vector<784x128xf32>
    %3 = arith.truncf %2 : vector<784x128xf32> to vector<784x128xbf16>
    %cst = arith.constant dense<0.000000e+00> : vector<8x128xf32>
    %4 = tpu.matmul %1, %3, %cst {dimension_numbers = #tpu.dot_dimension_numbers<[1], [0], [0], [1], [0, 0, 1, 1], [], []>} : vector<8x784xbf16>, vector<784x128xbf16>, vector<8x128xf32> -> vector<8x128xf32>
    %c0_3 = arith.constant 0 : index
    %c0_4 = arith.constant 0 : index
    %5 = vector.load %arg3[%c0_3, %c0_4] : memref<1x128xf32, #tpu.memory_space<vmem>>, vector<1x128xf32>
    %6 = vector.broadcast %5 : vector<1x128xf32> to vector<8x128xf32>
    %7 = arith.addf %4, %6 : vector<8x128xf32>
    %cst_5 = arith.constant 0.000000e+00 : f32
    %8 = vector.broadcast %cst_5 : f32 to vector<8x128xf32>
    %9 = arith.maximumf %7, %8 : vector<8x128xf32>
    %10 = arith.truncf %9 : vector<8x128xf32> to vector<8x128xbf16>
    %c0_6 = arith.constant 0 : index
    %c0_7 = arith.constant 0 : index
    %11 = vector.load %arg4[%c0_6, %c0_7] : memref<128x128xf32, #tpu.memory_space<vmem>>, vector<128x128xf32>
    %12 = arith.truncf %11 : vector<128x128xf32> to vector<128x128xbf16>
    %cst_8 = arith.constant dense<0.000000e+00> : vector<8x128xf32>
    %13 = tpu.matmul %10, %12, %cst_8 {dimension_numbers = #tpu.dot_dimension_numbers<[1], [0], [0], [1], [0, 0, 1, 1], [], []>} : vector<8x128xbf16>, vector<128x128xbf16>, vector<8x128xf32> -> vector<8x128xf32>
    %c0_9 = arith.constant 0 : index
    %c0_10 = arith.constant 0 : index
    %14 = vector.load %arg5[%c0_9, %c0_10] : memref<1x128xf32, #tpu.memory_space<vmem>>, vector<1x128xf32>
    %15 = vector.broadcast %14 : vector<1x128xf32> to vector<8x128xf32>
    %16 = arith.addf %13, %15 : vector<8x128xf32>
    %c0_11 = arith.constant 0 : index
    %c0_12 = arith.constant 0 : index
    %17 = vector.load %arg6[%c0_11, %c0_12] : memref<8x128xf32, #tpu.memory_space<vmem>>, vector<8x128xf32>
    tpu.vector_store %arg6[%c0_11, %c0_12], %16 {strides = array<i32>} : memref<8x128xf32, #tpu.memory_space<vmem>>, vector<8x128xf32>,
    return
  }
  func.func @transform_0(%arg0: i32) -> (i32, i32) {
    %c0_i32 = arith.constant 0 : i32
    %c0_i32_0 = arith.constant 0 : i32
    return %arg0, %c0_i32 : i32, i32
  }
  func.func @transform_1(%arg0: i32) -> (i32, i32) {
    %c0_i32 = arith.constant 0 : i32
    %c0_i32_0 = arith.constant 0 : i32
    %c0_i32_1 = arith.constant 0 : i32
    return %c0_i32, %c0_i32_0 : i32, i32
  }
  func.func @transform_2(%arg0: i32) -> (i32, i32) {
    %c0_i32 = arith.constant 0 : i32
    %c0_i32_0 = arith.constant 0 : i32
    %c0_i32_1 = arith.constant 0 : i32
    return %c0_i32, %c0_i32_0 : i32, i32
  }
  func.func @transform_3(%arg0: i32) -> (i32, i32) {
    %c0_i32 = arith.constant 0 : i32
    %c0_i32_0 = arith.constant 0 : i32
    %c0_i32_1 = arith.constant 0 : i32
    return %c0_i32, %c0_i32_0 : i32, i32
  }
  func.func @transform_4(%arg0: i32) -> (i32, i32) {
    %c0_i32 = arith.constant 0 : i32
    %c0_i32_0 = arith.constant 0 : i32
    %c0_i32_1 = arith.constant 0 : i32
    return %c0_i32, %c0_i32_0 : i32, i32
  }
  func.func @transform_5(%arg0: i32) -> (i32, i32) {
    %c0_i32 = arith.constant 0 : i32
    %c0_i32_0 = arith.constant 0 : i32
    return %arg0, %c0_i32 : i32, i32
  }
}

</mosaic_0001>

<llo_original>
// kernel: neural_net_forward.1
$region0: #{neural_net_forward.1}
  #allocation0 [shape = 'u32[]', space=smem, size = 0x4, offset = 0x4, fixed_abs, tag = 'smem constant byte address 0x4 - core index']
  #allocation1 [shape = 'u32[144,128]{1,0:T(1,128)}', space=vmem, size = 0x12000, scoped, tag = 'internal scratch']
  %s0 = inlined_call_operand.vmem [shape: f32[8,784], index: 0, kind: input, shape index: {}]
  %s1 = inlined_call_operand.vmem [shape: f32[784,128], index: 1, kind: input, shape index: {}]
  %s2 = inlined_call_operand.vmem [shape: f32[1,128], index: 2, kind: input, shape index: {}]
  %s3 = inlined_call_operand.vmem [shape: f32[128,128], index: 3, kind: input, shape index: {}]
  %s4 = inlined_call_operand.vmem [shape: f32[1,128], index: 4, kind: input, shape index: {}]
  %s5 = inlined_call_operand.hbm [shape: f32[8,128], index: 5, kind: output, shape index: {}]
  %s6 = sld [smem:[#allocation0]]
  $region30: #{neural_net_forward.1} parent=0
    _
  %s8 = ssub.s32 1, %s6
  %s9 = scalar_select 0, %s8, %s6
  $region1: #{neural_net_forward.1} parent=0
    #allocation2 [shape = 'u8[4096]{0}', space=vmem, size = 0x1000, scoped, tag = 'output window, operand 0, single buffered']
    #allocation3 [shape = 's32[1]{0}', space=sflag, size = 0x4, scoped, tag = 'scoped memory for neural_net_forward.1']
    %10 = vsyncpa [#allocation3], 0
    // Predicated region
    $region2: #{neural_net_forward.1} parent=1 // pred_check
      _
    $region3: #{neural_net_forward.1} parent=1 // pred_check_branch
      %12 = sbr.rel (0) target = $region5
    $region4: #{neural_net_forward.1} parent=1 // pred_region
      _
    $region5: #{neural_net_forward.1} parent=1 // pred_fallthru
      _
    // Predicated region
    $region6: #{neural_net_forward.1} parent=1 // pred_check
      _
    $region7: #{neural_net_forward.1} parent=1 // pred_check_branch
      %14 = sbr.rel (0) target = $region9
    $region8: #{neural_net_forward.1} parent=1 // pred_region
      _
    $region9: #{neural_net_forward.1} parent=1 // pred_fallthru
      _
    // Predicated region
    $region10: #{neural_net_forward.1} parent=1 // pred_check
      _
    $region11: #{neural_net_forward.1} parent=1 // pred_check_branch
      %16 = sbr.rel (0) target = $region13
    $region12: #{neural_net_forward.1} parent=1 // pred_region
      _
    $region13: #{neural_net_forward.1} parent=1 // pred_fallthru
      _
    // Predicated region
    $region14: #{neural_net_forward.1} parent=1 // pred_check
      _
    $region15: #{neural_net_forward.1} parent=1 // pred_check_branch
      %18 = sbr.rel (0) target = $region17
    $region16: #{neural_net_forward.1} parent=1 // pred_region
      _
    $region17: #{neural_net_forward.1} parent=1 // pred_fallthru
      _
    // Predicated region
    $region18: #{neural_net_forward.1} parent=1 // pred_check
      _
    $region19: #{neural_net_forward.1} parent=1 // pred_check_branch
      %20 = sbr.rel (0) target = $region21
    $region20: #{neural_net_forward.1} parent=1 // pred_region
      _
    $region21: #{neural_net_forward.1} parent=1 // pred_fallthru
      _
    %v22 = vld [vmem:[%s0] sm:$0xff]
    %v23 = vld [vmem:[%s0 + $0x8] sm:$0xff]
    %v24 = vld [vmem:[%s0 + $0x10] sm:$0xff]
    %v25 = vld [vmem:[%s0 + $0x18] sm:$0xff]
    %v26 = vld [vmem:[%s0 + $0x20] sm:$0xff]
    %v27 = vld [vmem:[%s0 + $0x28] sm:$0xff]
    %v28 = vld [vmem:[%s0 + $0x30] sm:$0xff]
    %v29 = vpack.c.bf16 %v22, %v22
    %v30 = vpack.c.bf16 %v23, %v23
    %v31 = vpack.c.bf16 %v24, %v24
    %v32 = vpack.c.bf16 %v25, %v25
    %v33 = vpack.c.bf16 %v26, %v26
    %v34 = vpack.c.bf16 %v27, %v27
    %v35 = vpack.c.bf16 %v28, %v28
    %v36 = vld [vmem:[%s1] sm:$0xff]
    %v37 = vld [vmem:[%s1 + $0x8] sm:$0xff]
    %v38 = vld [vmem:[%s1 + $0x10] sm:$0xff]
    %v39 = vld [vmem:[%s1 + $0x18] sm:$0xff]
    %v40 = vld [vmem:[%s1 + $0x20] sm:$0xff]
    %v41 = vld [vmem:[%s1 + $0x28] sm:$0xff]
    %v42 = vld [vmem:[%s1 + $0x30] sm:$0xff]
    %v43 = vld [vmem:[%s1 + $0x38] sm:$0xff]
    %v44 = vld [vmem:[%s1 + $0x40] sm:$0xff]
    %v45 = vld [vmem:[%s1 + $0x48] sm:$0xff]
    %v46 = vld [vmem:[%s1 + $0x50] sm:$0xff]
    %v47 = vld [vmem:[%s1 + $0x58] sm:$0xff]
    %v48 = vld [vmem:[%s1 + $0x60] sm:$0xff]
    %v49 = vld [vmem:[%s1 + $0x68] sm:$0xff]
    %v50 = vld [vmem:[%s1 + $0x70] sm:$0xff]
    %v51 = vld [vmem:[%s1 + $0x78] sm:$0xff]
    %v52 = vld [vmem:[%s1 + $0x80] sm:$0xff]
    %v53 = vld [vmem:[%s1 + $0x88] sm:$0xff]
    %v54 = vld [vmem:[%s1 + $0x90] sm:$0xff]
    %v55 = vld [vmem:[%s1 + $0x98] sm:$0xff]
    %v56 = vld [vmem:[%s1 + $0xa0] sm:$0xff]
    %v57 = vld [vmem:[%s1 + $0xa8] sm:$0xff]
    %v58 = vld [vmem:[%s1 + $0xb0] sm:$0xff]
    %v59 = vld [vmem:[%s1 + $0xb8] sm:$0xff]
    %v60 = vld [vmem:[%s1 + $0xc0] sm:$0xff]
    %v61 = vld [vmem:[%s1 + $0xc8] sm:$0xff]
    %v62 = vld [vmem:[%s1 + $0xd0] sm:$0xff]
    %v63 = vld [vmem:[%s1 + $0xd8] sm:$0xff]
    %v64 = vld [vmem:[%s1 + $0xe0] sm:$0xff]
    %v65 = vld [vmem:[%s1 + $0xe8] sm:$0xff]
    %v66 = vld [vmem:[%s1 + $0xf0] sm:$0xff]
    %v67 = vld [vmem:[%s1 + $0xf8] sm:$0xff]
    %v68 = vld [vmem:[%s1 + $0x100] sm:$0xff]
    %v69 = vld [vmem:[%s1 + $0x108] sm:$0xff]
    %v70 = vld [vmem:[%s1 + $0x110] sm:$0xff]
    %v71 = vld [vmem:[%s1 + $0x118] sm:$0xff]
    %v72 = vld [vmem:[%s1 + $0x120] sm:$0xff]
    %v73 = vld [vmem:[%s1 + $0x128] sm:$0xff]
    %v74 = vld [vmem:[%s1 + $0x130] sm:$0xff]
    %v75 = vld [vmem:[%s1 + $0x138] sm:$0xff]
    %v76 = vld [vmem:[%s1 + $0x140] sm:$0xff]
    %v77 = vld [vmem:[%s1 + $0x148] sm:$0xff]
    %v78 = vld [vmem:[%s1 + $0x150] sm:$0xff]
    %v79 = vld [vmem:[%s1 + $0x158] sm:$0xff]
    %v80 = vld [vmem:[%s1 + $0x160] sm:$0xff]
    %v81 = vld [vmem:[%s1 + $0x168] sm:$0xff]
    %v82 = vld [vmem:[%s1 + $0x170] sm:$0xff]
    %v83 = vld [vmem:[%s1 + $0x178] sm:$0xff]
    %v84 = vld [vmem:[%s1 + $0x180] sm:$0xff]
    %v85 = vld [vmem:[%s1 + $0x188] sm:$0xff]
    %v86 = vld [vmem:[%s1 + $0x190] sm:$0xff]
    %v87 = vld [vmem:[%s1 + $0x198] sm:$0xff]
    %v88 = vld [vmem:[%s1 + $0x1a0] sm:$0xff]
    %v89 = vld [vmem:[%s1 + $0x1a8] sm:$0xff]
    %v90 = vld [vmem:[%s1 + $0x1b0] sm:$0xff]
    %v91 = vld [vmem:[%s1 + $0x1b8] sm:$0xff]
    %v92 = vld [vmem:[%s1 + $0x1c0] sm:$0xff]
    %v93 = vld [vmem:[%s1 + $0x1c8] sm:$0xff]
    %v94 = vld [vmem:[%s1 + $0x1d0] sm:$0xff]
    %v95 = vld [vmem:[%s1 + $0x1d8] sm:$0xff]
    %v96 = vld [vmem:[%s1 + $0x1e0] sm:$0xff]
    %v97 = vld [vmem:[%s1 + $0x1e8] sm:$0xff]
    %v98 = vld [vmem:[%s1 + $0x1f0] sm:$0xff]
    %v99 = vld [vmem:[%s1 + $0x1f8] sm:$0xff]
    %v100 = vld [vmem:[%s1 + $0x200] sm:$0xff]
    %v101 = vld [vmem:[%s1 + $0x208] sm:$0xff]
    %v102 = vld [vmem:[%s1 + $0x210] sm:$0xff]
    %v103 = vld [vmem:[%s1 + $0x218] sm:$0xff]
    %v104 = vld [vmem:[%s1 + $0x220] sm:$0xff]
    %v105 = vld [vmem:[%s1 + $0x228] sm:$0xff]
    %v106 = vld [vmem:[%s1 + $0x230] sm:$0xff]
    %v107 = vld [vmem:[%s1 + $0x238] sm:$0xff]
    %v108 = vld [vmem:[%s1 + $0x240] sm:$0xff]
    %v109 = vld [vmem:[%s1 + $0x248] sm:$0xff]
    %v110 = vld [vmem:[%s1 + $0x250] sm:$0xff]
    %v111 = vld [vmem:[%s1 + $0x258] sm:$0xff]
    %v112 = vld [vmem:[%s1 + $0x260] sm:$0xff]
    %v113 = vld [vmem:[%s1 + $0x268] sm:$0xff]
    %v114 = vld [vmem:[%s1 + $0x270] sm:$0xff]
    %v115 = vld [vmem:[%s1 + $0x278] sm:$0xff]
    %v116 = vld [vmem:[%s1 + $0x280] sm:$0xff]
    %v117 = vld [vmem:[%s1 + $0x288] sm:$0xff]
    %v118 = vld [vmem:[%s1 + $0x290] sm:$0xff]
    %v119 = vld [vmem:[%s1 + $0x298] sm:$0xff]
    %v120 = vld [vmem:[%s1 + $0x2a0] sm:$0xff]
    %v121 = vld [vmem:[%s1 + $0x2a8] sm:$0xff]
    %v122 = vld [vmem:[%s1 + $0x2b0] sm:$0xff]
    %v123 = vld [vmem:[%s1 + $0x2b8] sm:$0xff]
    %v124 = vld [vmem:[%s1 + $0x2c0] sm:$0xff]
    %v125 = vld [vmem:[%s1 + $0x2c8] sm:$0xff]
    %v126 = vld [vmem:[%s1 + $0x2d0] sm:$0xff]
    %v127 = vld [vmem:[%s1 + $0x2d8] sm:$0xff]
    %v128 = vld [vmem:[%s1 + $0x2e0] sm:$0xff]
    %v129 = vld [vmem:[%s1 + $0x2e8] sm:$0xff]
    %v130 = vld [vmem:[%s1 + $0x2f0] sm:$0xff]
    %v131 = vld [vmem:[%s1 + $0x2f8] sm:$0xff]
    %v132 = vld [vmem:[%s1 + $0x300] sm:$0xff]
    %v133 = vld [vmem:[%s1 + $0x308] sm:$0xff]
    %v134 = vpack.c.bf16 %v37, %v36
    %v135 = vpack.c.bf16 %v39, %v38
    %v136 = vpack.c.bf16 %v41, %v40
    %v137 = vpack.c.bf16 %v43, %v42
    %v138 = vpack.c.bf16 %v45, %v44
    %v139 = vpack.c.bf16 %v47, %v46
    %v140 = vpack.c.bf16 %v49, %v48
    %v141 = vpack.c.bf16 %v51, %v50
    %v142 = vpack.c.bf16 %v53, %v52
    %v143 = vpack.c.bf16 %v55, %v54
    %v144 = vpack.c.bf16 %v57, %v56
    %v145 = vpack.c.bf16 %v59, %v58
    %v146 = vpack.c.bf16 %v61, %v60
    %v147 = vpack.c.bf16 %v63, %v62
    %v148 = vpack.c.bf16 %v65, %v64
    %v149 = vpack.c.bf16 %v67, %v66
    %v150 = vpack.c.bf16 %v69, %v68
    %v151 = vpack.c.bf16 %v71, %v70
    %v152 = vpack.c.bf16 %v73, %v72
    %v153 = vpack.c.bf16 %v75, %v74
    %v154 = vpack.c.bf16 %v77, %v76
    %v155 = vpack.c.bf16 %v79, %v78
    %v156 = vpack.c.bf16 %v81, %v80
    %v157 = vpack.c.bf16 %v83, %v82
    %v158 = vpack.c.bf16 %v85, %v84
    %v159 = vpack.c.bf16 %v87, %v86
    %v160 = vpack.c.bf16 %v89, %v88
    %v161 = vpack.c.bf16 %v91, %v90
    %v162 = vpack.c.bf16 %v93, %v92
    %v163 = vpack.c.bf16 %v95, %v94
    %v164 = vpack.c.bf16 %v97, %v96
    %v165 = vpack.c.bf16 %v99, %v98
    %v166 = vpack.c.bf16 %v101, %v100
    %v167 = vpack.c.bf16 %v103, %v102
    %v168 = vpack.c.bf16 %v105, %v104
    %v169 = vpack.c.bf16 %v107, %v106
    %v170 = vpack.c.bf16 %v109, %v108
    %v171 = vpack.c.bf16 %v111, %v110
    %v172 = vpack.c.bf16 %v113, %v112
    %v173 = vpack.c.bf16 %v115, %v114
    %v174 = vpack.c.bf16 %v117, %v116
    %v175 = vpack.c.bf16 %v119, %v118
    %v176 = vpack.c.bf16 %v121, %v120
    %v177 = vpack.c.bf16 %v123, %v122
    %v178 = vpack.c.bf16 %v125, %v124
    %v179 = vpack.c.bf16 %v127, %v126
    %v180 = vpack.c.bf16 %v129, %v128
    %v181 = vpack.c.bf16 %v131, %v130
    %v182 = vpack.c.bf16 %v133, %v132
    %v183 = vld [vmem:[%s2] sm:$0x1]
    %v185 = vlaneseq
    %v186 = vshrl.u32 %v185, 7
    %v187 = vsub.s32 0, %v186
    %v188 = vrot.slane %v183, %v187
    %vm190 = vcmask 130048
    %v192 = vsel %vm190, %v35, 0
    %194 = vmatprep.subr.bf16.mxu0 0
    %195 = vmatpush1.bf16.msra.mxu0 %v134
    %196 = vmatprep.subr.bf16.mxu0 0
    %197 = vmatpush1.bf16.msra.mxu0 %v135
    %198 = vmatprep.subr.bf16.mxu0 0
    %199 = vmatpush1.bf16.msra.mxu0 %v136
    %200 = vmatprep.subr.bf16.mxu0 0
    %201 = vmatpush1.bf16.msra.mxu0 %v137
    %202 = vmatprep.subr.bf16.mxu0 0
    %203 = vmatpush1.bf16.msra.mxu0 %v138
    %204 = vmatprep.subr.bf16.mxu0 0
    %205 = vmatpush1.bf16.msra.mxu0 %v139
    %206 = vmatprep.subr.bf16.mxu0 0
    %207 = vmatpush1.bf16.msra.mxu0 %v140
    %208 = vmatprep.subr.bf16.mxu0 0
    %209 = vmatpush1.bf16.msra.mxu0 %v141
    %210 = vmatprep.subr.bf16.mxu0 0
    %211 = vmatpush1.bf16.msra.mxu0 %v142
    %212 = vmatprep.subr.bf16.mxu0 0
    %213 = vmatpush1.bf16.msra.mxu0 %v143
    %214 = vmatprep.subr.bf16.mxu0 0
    %215 = vmatpush1.bf16.msra.mxu0 %v144
    %216 = vmatprep.subr.bf16.mxu0 0
    %217 = vmatpush1.bf16.msra.mxu0 %v145
    %218 = vmatprep.subr.bf16.mxu0 0
    %219 = vmatpush1.bf16.msra.mxu0 %v146
    %220 = vmatprep.subr.bf16.mxu0 0
    %221 = vmatpush1.bf16.msra.mxu0 %v147
    %222 = vmatprep.subr.bf16.mxu0 0
    %223 = vmatpush1.bf16.msra.mxu0 %v148
    %224 = vmatprep.subr.bf16.mxu0 0
    %225 = vmatpush1.bf16.msra.mxu0 %v149
    %226 = vmatprep.mubr.bf16.mxu0 %v30
    %227 = vmatmul.mubr.bf16.gmra.mrb[0].mxu0 %v29
    %v228 = vpop.f32.mrb[0].mxu0
    %v229 = vadd.f32 %v188, %v228
    %v230 = vpop.f32.mrb[0].mxu0
    %v231 = vpop.f32.mrb[0].mxu0
    %v232 = vpop.f32.mrb[0].mxu0
    %233 = vdwg.mxu0
    %234 = vmatprep.subr.bf16.mxu0 0
    %235 = vmatpush1.bf16.msra.mxu0 %v150
    %236 = vmatprep.subr.bf16.mxu0 0
    %237 = vmatpush1.bf16.msra.mxu0 %v151
    %238 = vmatprep.subr.bf16.mxu0 0
    %239 = vmatpush1.bf16.msra.mxu0 %v152
    %240 = vmatprep.subr.bf16.mxu0 0
    %241 = vmatpush1.bf16.msra.mxu0 %v153
    %242 = vmatprep.subr.bf16.mxu0 0
    %243 = vmatpush1.bf16.msra.mxu0 %v154
    %244 = vmatprep.subr.bf16.mxu0 0
    %245 = vmatpush1.bf16.msra.mxu0 %v155
    %246 = vmatprep.subr.bf16.mxu0 0
    %247 = vmatpush1.bf16.msra.mxu0 %v156
    %248 = vmatprep.subr.bf16.mxu0 0
    %249 = vmatpush1.bf16.msra.mxu0 %v157
    %250 = vmatprep.subr.bf16.mxu0 0
    %251 = vmatpush1.bf16.msra.mxu0 %v158
    %252 = vmatprep.subr.bf16.mxu0 0
    %253 = vmatpush1.bf16.msra.mxu0 %v159
    %254 = vmatprep.subr.bf16.mxu0 0
    %255 = vmatpush1.bf16.msra.mxu0 %v160
    %256 = vmatprep.subr.bf16.mxu0 0
    %257 = vmatpush1.bf16.msra.mxu0 %v161
    %258 = vmatprep.subr.bf16.mxu0 0
    %259 = vmatpush1.bf16.msra.mxu0 %v162
    %260 = vmatprep.subr.bf16.mxu0 0
    %261 = vmatpush1.bf16.msra.mxu0 %v163
    %262 = vmatprep.subr.bf16.mxu0 0
    %263 = vmatpush1.bf16.msra.mxu0 %v164
    %264 = vmatprep.subr.bf16.mxu0 0
    %265 = vmatpush1.bf16.msra.mxu0 %v165
    %266 = vmatprep.mubr.bf16.mxu0 %v32
    %267 = vmatmul.mubr.bf16.gmra.mrb[0].mxu0 %v31
    %v268 = vpop.f32.mrb[0].mxu0
    %v269 = vadd.f32 %v229, %v268
    %v270 = vpop.f32.mrb[0].mxu0
    %v271 = vpop.f32.mrb[0].mxu0
    %v272 = vpop.f32.mrb[0].mxu0
    %273 = vdwg.mxu0
    %274 = vmatprep.subr.bf16.mxu0 0
    %275 = vmatpush1.bf16.msra.mxu0 %v166
    %276 = vmatprep.subr.bf16.mxu0 0
    %277 = vmatpush1.bf16.msra.mxu0 %v167
    %278 = vmatprep.subr.bf16.mxu0 0
    %279 = vmatpush1.bf16.msra.mxu0 %v168
    %280 = vmatprep.subr.bf16.mxu0 0
    %281 = vmatpush1.bf16.msra.mxu0 %v169
    %282 = vmatprep.subr.bf16.mxu0 0
    %283 = vmatpush1.bf16.msra.mxu0 %v170
    %284 = vmatprep.subr.bf16.mxu0 0
    %285 = vmatpush1.bf16.msra.mxu0 %v171
    %286 = vmatprep.subr.bf16.mxu0 0
    %287 = vmatpush1.bf16.msra.mxu0 %v172
    %288 = vmatprep.subr.bf16.mxu0 0
    %289 = vmatpush1.bf16.msra.mxu0 %v173
    %290 = vmatprep.subr.bf16.mxu0 0
    %291 = vmatpush1.bf16.msra.mxu0 %v174
    %292 = vmatprep.subr.bf16.mxu0 0
    %293 = vmatpush1.bf16.msra.mxu0 %v175
    %294 = vmatprep.subr.bf16.mxu0 0
    %295 = vmatpush1.bf16.msra.mxu0 %v176
    %296 = vmatprep.subr.bf16.mxu0 0
    %297 = vmatpush1.bf16.msra.mxu0 %v177
    %298 = vmatprep.subr.bf16.mxu0 0
    %299 = vmatpush1.bf16.msra.mxu0 %v178
    %300 = vmatprep.subr.bf16.mxu0 0
    %301 = vmatpush1.bf16.msra.mxu0 %v179
    %302 = vmatprep.subr.bf16.mxu0 0
    %303 = vmatpush1.bf16.msra.mxu0 %v180
    %304 = vmatprep.subr.bf16.mxu0 0
    %305 = vmatpush1.bf16.msra.mxu0 %v181
    %306 = vmatprep.mubr.bf16.mxu0 %v34
    %307 = vmatmul.mubr.bf16.gmra.mrb[0].mxu0 %v33
    %v308 = vpop.f32.mrb[0].mxu0
    %v309 = vadd.f32 %v269, %v308
    %v310 = vpop.f32.mrb[0].mxu0
    %v311 = vpop.f32.mrb[0].mxu0
    %v312 = vpop.f32.mrb[0].mxu0
    %313 = vdwg.mxu0
    %314 = vmatprep.subr.bf16.mxu0 0
    %315 = vmatpush1.bf16.msra.mxu0 %v182
    %316 = vmatprep.subr.bf16.mxu0 0
    %317 = vmatpush1.bf16.msra.mxu0 0
    %318 = vmatprep.subr.bf16.mxu0 0
    %319 = vmatpush1.bf16.msra.mxu0 0
    %320 = vmatprep.subr.bf16.mxu0 0
    %321 = vmatpush1.bf16.msra.mxu0 0
    %322 = vmatprep.subr.bf16.mxu0 0
    %323 = vmatpush1.bf16.msra.mxu0 0
    %324 = vmatprep.subr.bf16.mxu0 0
    %325 = vmatpush1.bf16.msra.mxu0 0
    %326 = vmatprep.subr.bf16.mxu0 0
    %327 = vmatpush1.bf16.msra.mxu0 0
    %328 = vmatprep.subr.bf16.mxu0 0
    %329 = vmatpush1.bf16.msra.mxu0 0
    %330 = vmatprep.subr.bf16.mxu0 0
    %331 = vmatpush1.bf16.msra.mxu0 0
    %332 = vmatprep.subr.bf16.mxu0 0
    %333 = vmatpush1.bf16.msra.mxu0 0
    %334 = vmatprep.subr.bf16.mxu0 0
    %335 = vmatpush1.bf16.msra.mxu0 0
    %336 = vmatprep.subr.bf16.mxu0 0
    %337 = vmatpush1.bf16.msra.mxu0 0
    %338 = vmatprep.subr.bf16.mxu0 0
    %339 = vmatpush1.bf16.msra.mxu0 0
    %340 = vmatprep.subr.bf16.mxu0 0
    %341 = vmatpush1.bf16.msra.mxu0 0
    %342 = vmatprep.subr.bf16.mxu0 0
    %343 = vmatpush1.bf16.msra.mxu0 0
    %344 = vmatprep.subr.bf16.mxu0 0
    %345 = vmatpush1.bf16.msra.mxu0 0
    %346 = vmatprep.mubr.bf16.mxu0 0
    %347 = vmatmul.mubr.bf16.gmra.mrb[0].mxu0 %v192
    %v348 = vpop.f32.mrb[0].mxu0
    %v349 = vadd.f32 %v309, %v348
    %v350 = vpop.f32.mrb[0].mxu0
    %v351 = vpop.f32.mrb[0].mxu0
    %v352 = vpop.f32.mrb[0].mxu0
    %353 = vdwg.mxu0
    %v354 = vmax.f32 %v349, 0.0
    %v355 = vpack.c.bf16 %v354, %v354
    %v356 = vld [vmem:[%s3] sm:$0xff]
    %v357 = vld [vmem:[%s3 + $0x8] sm:$0xff]
    %v358 = vld [vmem:[%s3 + $0x10] sm:$0xff]
    %v359 = vld [vmem:[%s3 + $0x18] sm:$0xff]
    %v360 = vld [vmem:[%s3 + $0x20] sm:$0xff]
    %v361 = vld [vmem:[%s3 + $0x28] sm:$0xff]
    %v362 = vld [vmem:[%s3 + $0x30] sm:$0xff]
    %v363 = vld [vmem:[%s3 + $0x38] sm:$0xff]
    %v364 = vld [vmem:[%s3 + $0x40] sm:$0xff]
    %v365 = vld [vmem:[%s3 + $0x48] sm:$0xff]
    %v366 = vld [vmem:[%s3 + $0x50] sm:$0xff]
    %v367 = vld [vmem:[%s3 + $0x58] sm:$0xff]
    %v368 = vld [vmem:[%s3 + $0x60] sm:$0xff]
    %v369 = vld [vmem:[%s3 + $0x68] sm:$0xff]
    %v370 = vld [vmem:[%s3 + $0x70] sm:$0xff]
    %v371 = vld [vmem:[%s3 + $0x78] sm:$0xff]
    %v372 = vpack.c.bf16 %v357, %v356
    %v373 = vpack.c.bf16 %v359, %v358
    %v374 = vpack.c.bf16 %v361, %v360
    %v375 = vpack.c.bf16 %v363, %v362
    %v376 = vpack.c.bf16 %v365, %v364
    %v377 = vpack.c.bf16 %v367, %v366
    %v378 = vpack.c.bf16 %v369, %v368
    %v379 = vpack.c.bf16 %v371, %v370
    %v380 = vld [vmem:[%s4] sm:$0x1]
    %v382 = vlaneseq
    %v383 = vshrl.u32 %v382, 7
    %v384 = vsub.s32 0, %v383
    %v385 = vrot.slane %v380, %v384
    %387 = vmatprep.subr.bf16.mxu0 0
    %388 = vmatpush1.bf16.msra.mxu0 %v372
    %389 = vmatprep.subr.bf16.mxu0 0
    %390 = vmatpush1.bf16.msra.mxu0 %v373
    %391 = vmatprep.subr.bf16.mxu0 0
    %392 = vmatpush1.bf16.msra.mxu0 %v374
    %393 = vmatprep.subr.bf16.mxu0 0
    %394 = vmatpush1.bf16.msra.mxu0 %v375
    %395 = vmatprep.subr.bf16.mxu0 0
    %396 = vmatpush1.bf16.msra.mxu0 %v376
    %397 = vmatprep.subr.bf16.mxu0 0
    %398 = vmatpush1.bf16.msra.mxu0 %v377
    %399 = vmatprep.subr.bf16.mxu0 0
    %400 = vmatpush1.bf16.msra.mxu0 %v378
    %401 = vmatprep.subr.bf16.mxu0 0
    %402 = vmatpush1.bf16.msra.mxu0 %v379
    %403 = vmatprep.subr.bf16.mxu0 0
    %404 = vmatpush1.bf16.msra.mxu0 0
    %405 = vmatprep.subr.bf16.mxu0 0
    %406 = vmatpush1.bf16.msra.mxu0 0
    %407 = vmatprep.subr.bf16.mxu0 0
    %408 = vmatpush1.bf16.msra.mxu0 0
    %409 = vmatprep.subr.bf16.mxu0 0
    %410 = vmatpush1.bf16.msra.mxu0 0
    %411 = vmatprep.subr.bf16.mxu0 0
    %412 = vmatpush1.bf16.msra.mxu0 0
    %413 = vmatprep.subr.bf16.mxu0 0
    %414 = vmatpush1.bf16.msra.mxu0 0
    %415 = vmatprep.subr.bf16.mxu0 0
    %416 = vmatpush1.bf16.msra.mxu0 0
    %417 = vmatprep.subr.bf16.mxu0 0
    %418 = vmatpush1.bf16.msra.mxu0 0
    %419 = vmatprep.mubr.bf16.mxu0 0
    %420 = vmatmul.mubr.bf16.gmra.mrb[0].mxu0 %v355
    %v421 = vpop.f32.mrb[0].mxu0
    %v422 = vadd.f32 %v385, %v421
    %v423 = vpop.f32.mrb[0].mxu0
    %v424 = vpop.f32.mrb[0].mxu0
    %v425 = vpop.f32.mrb[0].mxu0
    %426 = vdwg.mxu0
    %427 = vst [vmem:[#allocation2] sm:$0xff] %v422
    // Predicated region
    $region22: #{neural_net_forward.1} parent=1 // pred_check
      _
    $region23: #{neural_net_forward.1} parent=1 // pred_check_branch
      %429 = sbr.rel (0) target = $region25
    $region24: #{neural_net_forward.1} parent=1 // pred_region
      %s431 = ssub.s32 128, 128
      %432 = vsyncadd [#allocation3], %s431
      %s434 = sshll.u32 [#allocation2], 4
      %s435 = int_to_ptr.vmem [resolvable:$true] %s434
      %437 = dma.vmem_to_hbm [thread:$0]  %s435, 128, %s5, [#allocation3]
    $region25: #{neural_net_forward.1} parent=1 // pred_fallthru
      _
    // Predicated region
    $region26: #{neural_net_forward.1} parent=1 // pred_check
      _
    $region27: #{neural_net_forward.1} parent=1 // pred_check_branch
      %439 = sbr.rel (0) target = $region29
    $region28: #{neural_net_forward.1} parent=1 // pred_region
      %440 = dma.done [#allocation3], 128
    $region29: #{neural_net_forward.1} parent=1 // pred_fallthru
      _
    %441 = vsyncpa [#allocation3], 1

</llo_original>
